<compile_context>
chip_gen: v5e
topology: v5e:2x2
jax: 0.10.0
libtpu: 0.0.40
codegen_flags: <defaults>
</compile_context>

<pallas_src>
import jax
import jax.numpy as jnp
from jax import lax
from jax.experimental import pallas as pl
from jax.experimental.pallas import tpu as pltpu

DISTANCE_TYPE = "cosine"                  # matches nn.Module default
TEMPORAL_CONSISTENCY_WEIGHT = 0.1         # matches nn.Module default
_EPS = 1e-12                              # F.normalize eps


def _bimhm_kernel(q_ref, st_ref, out_ref):
    # q_ref: (BB, Nq, C), st_ref: (BB, C, Ns) [support pre-transposed in wrapper]
    # out_ref: (1, BB) float32 — lane-dense row of per-batch losses.
    q = q_ref[...].astype(jnp.float32)
    st = st_ref[...].astype(jnp.float32)
    BB, Nq, C = q.shape
    _, _, Ns = st.shape
    eps2 = jnp.float32(_EPS * _EPS)
    inv_nq = jnp.float32(1.0 / Nq)
    inv_ns = jnp.float32(1.0 / Ns)

    # --- inverse row norms (EUP rsqrt) ---------------------------------------
    # Query norms are folded into q before the matmul; support sum-of-squares is
    # a sublane reduce of the already-transposed tile -> lands in (1, Ns) row
    # layout directly (no transpose, no ones-matmul).
    q_inv = lax.rsqrt(jnp.maximum(jnp.sum(q * q, axis=2, keepdims=True), eps2))    # (BB,Nq,1)
    qn = q * q_inv                                                                  # (BB,Nq,C)
    s_inv = lax.rsqrt(jnp.maximum(jnp.sum(st * st, axis=1, keepdims=True), eps2))  # (BB,1,Ns)

    # --- cosine similarity: canonical batched (Nq,C)x(C,Ns) MXU matmul --------
    dots = jnp.einsum("bqc,bcs->bqs", qn, st,
                      preferred_element_type=jnp.float32,
                      precision=lax.Precision.HIGHEST)                              # (BB,Nq,Ns)
    sim = dots * s_inv                                                              # one (Nq,Ns) VPU pass

    # --- bidirectional mean Hausdorff: min(1 - sim) == 1 - max(sim) -----------
    max_q2s = jnp.max(sim, axis=2, keepdims=True)                                   # (BB,Nq,1) lane reduce
    max_s2q = jnp.max(sim, axis=1, keepdims=True)                                   # (BB,1,Ns) sublane reduce
    mean_q2s = jnp.sum(max_q2s, axis=1, keepdims=True) * inv_nq                     # (BB,1,1)
    mean_s2q = jnp.sum(max_s2q, axis=2, keepdims=True) * inv_ns                     # (BB,1,1)
    bi_mhm = 1.0 - 0.5 * (mean_q2s + mean_s2q)                                      # (BB,1,1)

    # --- temporal consistency: relu(d) + relu(-d) == |d| on adjacent rows -----
    # dist = 1 - sim, so row differences of dist == -(row differences of sim).
    if Nq > 1:
        if Nq % 8 == 0:
            # Sublane-aligned: XLU rotate, wrap row masked *after* the lane
            # reduce (mask is (BB,Nq,1), not (BB,Nq,Ns)).
            rolled = pltpu.roll(sim, shift=Nq - 1, axis=1)       # rolled[:, i] = sim[:, (i+1) % Nq]
            row_abs = jnp.sum(jnp.abs(rolled - sim), axis=2, keepdims=True)         # (BB,Nq,1)
            ridx = lax.broadcasted_iota(jnp.int32, (BB, Nq, 1), 1)
            row_abs = jnp.where(ridx < Nq - 1, row_abs, 0.0)
        else:
            # Non-multiple-of-8 Nq: sliced halo (small relayout) instead of a
            # sublane rotate across padded rows.
            diff = sim[:, 1:, :] - sim[:, :-1, :]                                   # (BB,Nq-1,Ns)
            row_abs = jnp.sum(jnp.abs(diff), axis=2, keepdims=True)                 # (BB,Nq-1,1)
        tcl = jnp.sum(row_abs, axis=1, keepdims=True) * (inv_nq * inv_ns)           # (BB,1,1)
    else:
        tcl = jnp.zeros_like(bi_mhm)

    loss = bi_mhm + TEMPORAL_CONSISTENCY_WEIGHT * tcl                               # (BB,1,1)

    # --- sublane/major -> lane relayout for a lane-dense (1, BB) store --------
    # Done with plain VPU ops (iota + select + major-dim reduce); avoids relying
    # on a (BB,1)->(1,BB) reshape/transpose lowering.
    b_row = lax.broadcasted_iota(jnp.int32, (BB, 1, BB), 0)
    b_col = lax.broadcasted_iota(jnp.int32, (BB, 1, BB), 2)
    picked = jnp.where(b_row == b_col, loss, 0.0)                                   # (BB,1,BB)
    out_ref[...] = jnp.sum(picked, axis=0).astype(out_ref.dtype)                    # (1,BB)


def bi_mean_hausdorff_metric(query, support, *, batch_block=None):
    """query: (B, Nq, C), support: (B, Ns, C) -> (B,) float32 loss."""
    B, Nq, C = query.shape
    Bs, Ns, Cs = support.shape
    assert Bs == B and Cs == C

    itemsize = jnp.dtype(query.dtype).itemsize
    if batch_block is None:
        in_bytes = itemsize * C * (Nq + Ns)                         # input bytes per batch per step
        tmp_bytes = 4 * (3 * Nq * Ns + 2 * C * (Nq + Ns) + 8)       # f32 temporaries per batch
        want = -(-(1 << 20) // max(in_bytes, 1))                    # >= ~1 MiB of input per grid step
        cap = max(1, (20 << 20) // max(tmp_bytes + 2 * in_bytes, 1))  # keep VMEM comfortable
        batch_block = int(max(1, min(B, 256, want, cap)))
    BB = int(batch_block)
    nb = pl.cdiv(B, BB)
    Bp = nb * BB
    if Bp != B:  # zero-padding is safe: padded batches yield a finite loss, sliced off below
        pad = Bp - B
        query = jnp.pad(query, ((0, pad), (0, 0), (0, 0)))
        support = jnp.pad(support, ((0, pad), (0, 0), (0, 0)))

    # One-time HBM-layout transpose so the kernel does a canonical (Nq,C)x(C,Ns) matmul.
    support_t = jnp.swapaxes(support, 1, 2)                         # (Bp, C, Ns)

    try:
        vmem_cap = int(pltpu.get_tpu_info().vmem_capacity_bytes)
    except Exception:  # pragma: no cover - conservative fallback
        vmem_cap = 64 << 20
    vmem_limit = int(min(vmem_cap * 3 // 4, 96 << 20))              # ~48 MiB on v7x, ~96 MiB on v5e/v6e

    out = pl.pallas_call(
        _bimhm_kernel,
        grid=(nb,),
        out_shape=jax.ShapeDtypeStruct((nb, 1, BB), jnp.float32),
        in_specs=[
            pl.BlockSpec((BB, Nq, C), lambda b: (b, 0, 0)),
            pl.BlockSpec((BB, C, Ns), lambda b: (b, 0, 0)),
        ],
        out_specs=pl.BlockSpec((None, 1, BB), lambda b: (b, 0, 0)),
        compiler_params=pltpu.CompilerParams(
            dimension_semantics=("parallel",),
            vmem_limit_bytes=vmem_limit),
    )(query, support_t)
    return out.reshape(Bp)[:B]


def _reference(query, support):
    """Pure-JAX reference mirroring the PyTorch module (cosine path)."""
    q = query.astype(jnp.float32)
    s = support.astype(jnp.float32)
    qn = q / jnp.maximum(jnp.linalg.norm(q, axis=2, keepdims=True), _EPS)
    sn = s / jnp.maximum(jnp.linalg.norm(s, axis=2, keepdims=True), _EPS)
    dist = 1.0 - jnp.einsum("bqc,bsc->bqs", qn, sn, precision=lax.Precision.HIGHEST)
    bi = 0.5 * (jnp.min(dist, axis=2).mean(axis=1)
                + jnp.min(dist, axis=1).mean(axis=1))
    shift_l = jnp.concatenate([dist[:, :1], dist[:, :-1]], axis=1)
    shift_r = jnp.concatenate([dist[:, 1:], dist[:, -1:]], axis=1)
    tcl = (jax.nn.relu(dist - shift_l).mean(axis=(1, 2))
           + jax.nn.relu(dist - shift_r).mean(axis=(1, 2)))
    return bi + TEMPORAL_CONSISTENCY_WEIGHT * tcl


if __name__ == "__main__":
    key = jax.random.PRNGKey(0)
    kq, ks = jax.random.split(key)
    B, Nq, Ns, C = 2, 8, 16, 32
    query = jax.random.normal(kq, (B, Nq, C), dtype=jnp.float32)
    support = jax.random.normal(ks, (B, Ns, C), dtype=jnp.float32)

    loss = bi_mean_hausdorff_metric(query, support)
    jax.block_until_ready(loss)
    ref = _reference(query, support)
    assert loss.shape == (B,)
    assert jnp.allclose(loss, ref, atol=1e-5, rtol=1e-5), (loss, ref)

    # Validate non-aligned shapes (review correctness concern): non-multiple-of-8
    # Nq (sliced TCL fallback), non-multiple-of-128 Ns, odd C, and a forced
    # batch_block that exercises batch padding + a multi-step grid.
    k2q, k2s = jax.random.split(jax.random.PRNGKey(0))
    B2, Nq2, Ns2, C2 = 3, 12, 24, 20
    q2 = jax.random.normal(k2q, (B2, Nq2, C2), dtype=jnp.float32)
    s2 = jax.random.normal(k2s, (B2, Ns2, C2), dtype=jnp.float32)
    loss2 = bi_mean_hausdorff_metric(q2, s2, batch_block=2)
    jax.block_until_ready(loss2)
    ref2 = _reference(q2, s2)
    assert loss2.shape == (B2,)
    assert jnp.allclose(loss2, ref2, atol=1e-5, rtol=1e-5), (loss2, ref2)

    print("KERNEL_OK")
</pallas_src>

<mosaic_0001>
module attributes {stable_mosaic.version = 11 : i64} {
  func.func @_bimhm_kernel(%arg0: i32, %arg1: memref<2x8x32xf32, #tpu.memory_space<vmem>>, %arg2: memref<2x32x16xf32, #tpu.memory_space<vmem>>, %arg3: memref<1x1x2xf32, #tpu.memory_space<vmem>>) attributes {dimension_semantics = [#tpu.dimension_semantics<parallel>], iteration_bounds = array<i64: 1>, scalar_prefetch = 0 : i64, scratch_operands = 0 : i64, tpu.core_type = #tpu.core_type<tc>, window_params = [{transform_indices = @transform_0, window_bounds = array<i64: 2, 8, 32>}, {transform_indices = @transform_1, window_bounds = array<i64: 2, 32, 16>}, {transform_indices = @transform_2, window_bounds = array<i64: 1, 1, 2>}]} {
    %c0 = arith.constant 0 : index
    %c0_0 = arith.constant 0 : index
    %c0_1 = arith.constant 0 : index
    %0 = vector.load %arg1[%c0, %c0_0, %c0_1] : memref<2x8x32xf32, #tpu.memory_space<vmem>>, vector<2x8x32xf32>
    %c0_2 = arith.constant 0 : index
    %c0_3 = arith.constant 0 : index
    %c0_4 = arith.constant 0 : index
    %1 = vector.load %arg2[%c0_2, %c0_3, %c0_4] : memref<2x32x16xf32, #tpu.memory_space<vmem>>, vector<2x32x16xf32>
    %2 = arith.mulf %0, %0 : vector<2x8x32xf32>
    %cst = arith.constant dense<0.000000e+00> : vector<2x8xf32>
    %3 = vector.multi_reduction <add>, %2, %cst [2] : vector<2x8x32xf32> to vector<2x8xf32>
    %4 = vector.shape_cast %3 : vector<2x8xf32> to vector<2x8x1xf32>
    %cst_5 = arith.constant 1.000000e-24 : f32
    %5 = vector.broadcast %cst_5 : f32 to vector<2x8x1xf32>
    %6 = arith.maximumf %4, %5 : vector<2x8x1xf32>
    %7 = math.rsqrt %6 : vector<2x8x1xf32>
    %8 = vector.broadcast %7 : vector<2x8x1xf32> to vector<2x8x32xf32>
    %9 = arith.mulf %0, %8 : vector<2x8x32xf32>
    %10 = arith.mulf %1, %1 : vector<2x32x16xf32>
    %cst_6 = arith.constant dense<0.000000e+00> : vector<2x16xf32>
    %11 = vector.multi_reduction <add>, %10, %cst_6 [1] : vector<2x32x16xf32> to vector<2x16xf32>
    %12 = vector.shape_cast %11 : vector<2x16xf32> to vector<2x1x16xf32>
    %cst_7 = arith.constant 1.000000e-24 : f32
    %13 = vector.broadcast %cst_7 : f32 to vector<2x1x16xf32>
    %14 = arith.maximumf %12, %13 : vector<2x1x16xf32>
    %15 = math.rsqrt %14 : vector<2x1x16xf32>
    "tpu.trace_start"() <{level = 10 : i32, message = "bqc,bcs->bqs"}> : () -> ()
    %cst_8 = arith.constant dense<0.000000e+00> : vector<2x8x16xf32>
    %16 = tpu.matmul %9, %1, %cst_8 {dimension_numbers = #tpu.dot_dimension_numbers<[2], [1], [1], [2], [0, 0, 0, 1, 1, 2], [0], [0]>, precision = #tpu.contract_precision<fp32>} : vector<2x8x32xf32>, vector<2x32x16xf32>, vector<2x8x16xf32> -> vector<2x8x16xf32>
    "tpu.trace_stop"() : () -> ()
    %17 = vector.broadcast %15 : vector<2x1x16xf32> to vector<2x8x16xf32>
    %18 = arith.mulf %16, %17 : vector<2x8x16xf32>
    %cst_9 = arith.constant dense<0xFF800000> : vector<2x8xf32>
    %19 = vector.multi_reduction <maximumf>, %18, %cst_9 [2] : vector<2x8x16xf32> to vector<2x8xf32>
    %20 = vector.shape_cast %19 : vector<2x8xf32> to vector<2x8x1xf32>
    %cst_10 = arith.constant dense<0xFF800000> : vector<2x16xf32>
    %21 = vector.multi_reduction <maximumf>, %18, %cst_10 [1] : vector<2x8x16xf32> to vector<2x16xf32>
    %22 = vector.shape_cast %21 : vector<2x16xf32> to vector<2x1x16xf32>
    %cst_11 = arith.constant dense<0.000000e+00> : vector<2x1xf32>
    %23 = vector.multi_reduction <add>, %20, %cst_11 [1] : vector<2x8x1xf32> to vector<2x1xf32>
    %24 = vector.shape_cast %23 : vector<2x1xf32> to vector<2x1x1xf32>
    %cst_12 = arith.constant 1.250000e-01 : f32
    %25 = vector.broadcast %cst_12 : f32 to vector<2x1x1xf32>
    %26 = arith.mulf %24, %25 : vector<2x1x1xf32>
    %cst_13 = arith.constant dense<0.000000e+00> : vector<2x1xf32>
    %27 = vector.multi_reduction <add>, %22, %cst_13 [2] : vector<2x1x16xf32> to vector<2x1xf32>
    %28 = vector.shape_cast %27 : vector<2x1xf32> to vector<2x1x1xf32>
    %cst_14 = arith.constant 6.250000e-02 : f32
    %29 = vector.broadcast %cst_14 : f32 to vector<2x1x1xf32>
    %30 = arith.mulf %28, %29 : vector<2x1x1xf32>
    %31 = arith.addf %26, %30 : vector<2x1x1xf32>
    %cst_15 = arith.constant 5.000000e-01 : f32
    %32 = vector.broadcast %cst_15 : f32 to vector<2x1x1xf32>
    %33 = arith.mulf %32, %31 : vector<2x1x1xf32>
    %cst_16 = arith.constant 1.000000e+00 : f32
    %34 = vector.broadcast %cst_16 : f32 to vector<2x1x1xf32>
    %35 = arith.subf %34, %33 : vector<2x1x1xf32>
    %c7_i32 = arith.constant 7 : i32
    %36 = tpu.dynamic_rotate %18 by %c7_i32 dim 1 : vector<2x8x16xf32>, i32 -> vector<2x8x16xf32>
    %37 = arith.subf %36, %18 : vector<2x8x16xf32>
    %38 = math.absf %37 : vector<2x8x16xf32>
    %cst_17 = arith.constant dense<0.000000e+00> : vector<2x8xf32>
    %39 = vector.multi_reduction <add>, %38, %cst_17 [2] : vector<2x8x16xf32> to vector<2x8xf32>
    %40 = vector.shape_cast %39 : vector<2x8xf32> to vector<2x8x1xf32>
    %41 = tpu.iota {dimensions = array<i32: 1>} : vector<2x8x1xi32>
    %c7_i32_18 = arith.constant 7 : i32
    %42 = vector.broadcast %c7_i32_18 : i32 to vector<2x8x1xi32>
    %43 = arith.cmpi slt, %41, %42 : vector<2x8x1xi32>
    %cst_19 = arith.constant 0.000000e+00 : f32
    %44 = vector.broadcast %cst_19 : f32 to vector<2x8x1xf32>
    %45 = arith.select %43, %40, %44 : vector<2x8x1xi1>, vector<2x8x1xf32>
    %cst_20 = arith.constant dense<0.000000e+00> : vector<2x1xf32>
    %46 = vector.multi_reduction <add>, %45, %cst_20 [1] : vector<2x8x1xf32> to vector<2x1xf32>
    %47 = vector.shape_cast %46 : vector<2x1xf32> to vector<2x1x1xf32>
    %cst_21 = arith.constant 1.250000e-01 : f32
    %cst_22 = arith.constant 6.250000e-02 : f32
    %48 = arith.mulf %cst_21, %cst_22 : f32
    %49 = vector.broadcast %48 : f32 to vector<2x1x1xf32>
    %50 = arith.mulf %47, %49 : vector<2x1x1xf32>
    %cst_23 = arith.constant 1.000000e-01 : f32
    %51 = vector.broadcast %cst_23 : f32 to vector<2x1x1xf32>
    %52 = arith.mulf %51, %50 : vector<2x1x1xf32>
    %53 = arith.addf %35, %52 : vector<2x1x1xf32>
    %54 = tpu.iota {dimensions = array<i32: 0>} : vector<2x1x2xi32>
    %55 = tpu.iota {dimensions = array<i32: 2>} : vector<2x1x2xi32>
    %56 = arith.cmpi eq, %54, %55 : vector<2x1x2xi32>
    %cst_24 = arith.constant 0.000000e+00 : f32
    %57 = vector.shape_cast %53 : vector<2x1x1xf32> to vector<2x1x1xf32>
    %58 = vector.broadcast %57 : vector<2x1x1xf32> to vector<2x1x2xf32>
    %59 = vector.broadcast %cst_24 : f32 to vector<2x1x2xf32>
    %60 = arith.select %56, %58, %59 : vector<2x1x2xi1>, vector<2x1x2xf32>
    %cst_25 = arith.constant dense<0.000000e+00> : vector<1x2xf32>
    %61 = vector.multi_reduction <add>, %60, %cst_25 [0] : vector<2x1x2xf32> to vector<1x2xf32>
    %c0_26 = arith.constant 0 : index
    %c0_27 = arith.constant 0 : index
    %c0_28 = arith.constant 0 : index
    %62 = vector.load %arg3[%c0_26, %c0_27, %c0_28] : memref<1x1x2xf32, #tpu.memory_space<vmem>>, vector<1x1x2xf32>
    %63 = vector.shape_cast %62 : vector<1x1x2xf32> to vector<1x2xf32>
    %64 = vector.shape_cast %61 : vector<1x2xf32> to vector<1x1x2xf32>
    tpu.vector_store %arg3[%c0_26, %c0_27, %c0_28], %64 {strides = array<i32>} : memref<1x1x2xf32, #tpu.memory_space<vmem>>, vector<1x1x2xf32>,
    return
  }
  func.func @transform_0(%arg0: i32) -> (i32, i32, i32) {
    %c0_i32 = arith.constant 0 : i32
    %c0_i32_0 = arith.constant 0 : i32
    %c0_i32_1 = arith.constant 0 : i32
    return %arg0, %c0_i32, %c0_i32_0 : i32, i32, i32
  }
  func.func @transform_1(%arg0: i32) -> (i32, i32, i32) {
    %c0_i32 = arith.constant 0 : i32
    %c0_i32_0 = arith.constant 0 : i32
    %c0_i32_1 = arith.constant 0 : i32
    return %arg0, %c0_i32, %c0_i32_0 : i32, i32, i32
  }
  func.func @transform_2(%arg0: i32) -> (i32, i32, i32) {
    %c0_i32 = arith.constant 0 : i32
    %c0_i32_0 = arith.constant 0 : i32
    %c0_i32_1 = arith.constant 0 : i32
    return %arg0, %c0_i32, %c0_i32_0 : i32, i32, i32
  }
}

</mosaic_0001>

<llo_original>
// kernel: tpu_custom_call.1
$region0: #{tpu_custom_call.1}
  #allocation0 [shape = 'u32[]', space=smem, size = 0x4, offset = 0x4, fixed_abs, tag = 'smem constant byte address 0x4 - core index']
  #allocation1 [shape = 'u32[72,128]{1,0:T(1,128)}', space=vmem, size = 0x9000, scoped, tag = 'internal scratch']
  %s0 = inlined_call_operand.vmem [shape: f32[2,8,32], index: 0, kind: input, shape index: {}]
  %s1 = inlined_call_operand.vmem [shape: f32[2,32,16], index: 1, kind: input, shape index: {}]
  %s2 = inlined_call_operand.hbm [shape: f32[1,1,2], index: 2, kind: output, shape index: {}]
  %s3 = sld [smem:[#allocation0]]
  $region18: #{tpu_custom_call.1} parent=0
    _
  %s5 = ssub.s32 1, %s3
  %s6 = scalar_select 0, %s5, %s3
  $region1: #{tpu_custom_call.1} parent=0
    #allocation2 [shape = 'u8[512]{0}', space=vmem, size = 0x400, scoped, tag = 'output window, operand 0, single buffered']
    #allocation3 [shape = 's32[1]{0}', space=sflag, size = 0x4, scoped, tag = 'scoped memory for tpu_custom_call.1']
    %7 = vsyncpa [#allocation3], 0
    // Predicated region
    $region2: #{tpu_custom_call.1} parent=1 // pred_check
      _
    $region3: #{tpu_custom_call.1} parent=1 // pred_check_branch
      %9 = sbr.rel (0) target = $region5
    $region4: #{tpu_custom_call.1} parent=1 // pred_region
      _
    $region5: #{tpu_custom_call.1} parent=1 // pred_fallthru
      _
    // Predicated region
    $region6: #{tpu_custom_call.1} parent=1 // pred_check
      _
    $region7: #{tpu_custom_call.1} parent=1 // pred_check_branch
      %11 = sbr.rel (0) target = $region9
    $region8: #{tpu_custom_call.1} parent=1 // pred_region
      _
    $region9: #{tpu_custom_call.1} parent=1 // pred_fallthru
      _
    %v12 = vld [vmem:[%s0] sm:$0xff]
    %v13 = vld [vmem:[%s0 + $0x8] sm:$0xff]
    %v14 = vld [vmem:[%s1] sm:$0xff]
    %v15 = vld [vmem:[%s1 + $0x8] sm:$0xff]
    %v16 = vld [vmem:[%s1 + $0x10] sm:$0xff]
    %v17 = vld [vmem:[%s1 + $0x18] sm:$0xff]
    %v18 = vld [vmem:[%s1 + $0x20] sm:$0xff]
    %v19 = vld [vmem:[%s1 + $0x28] sm:$0xff]
    %v20 = vld [vmem:[%s1 + $0x30] sm:$0xff]
    %v21 = vld [vmem:[%s1 + $0x38] sm:$0xff]
    %v22 = vmul.f32 %v12, %v12
    %v23 = vmul.f32 %v13, %v13
    %vm24 = vcmask 261120
    %v25 = vsel %vm24, %v22, 0.0
    %26 = vadd.xlane.f32.xlu0 %v25
    %v27 = vpop.xlane.xlu0 %26
    %v28 = vsel %vm24, %v23, 0.0
    %29 = vadd.xlane.f32.xlu0 %v28
    %v30 = vpop.xlane.xlu0 %29
    %v31 = vmax.f32 %v27, 1e-24
    %v32 = vmax.f32 %v30, 1e-24
    %v33 = vrsqrt.pop %v31
    %v34 = vmul.f32 %v33, %v31
    %v35 = vmul.f32 %v34, %v33
    %v36 = vmul.f32 0.5, %v35
    %v37 = vsub.f32 1.5, %v36
    %v38 = vmul.f32 %v33, %v37
    %vm39 = vweird.f32 %v31
    %vm40 = vweird.f32 %v33
    %vm41 = vmor %vm39, %vm40
    %v42 = vsel %vm41, %v33, %v38
    %v43 = vrsqrt.pop %v32
    %v44 = vmul.f32 %v43, %v32
    %v45 = vmul.f32 %v44, %v43
    %v46 = vmul.f32 0.5, %v45
    %v47 = vsub.f32 1.5, %v46
    %v48 = vmul.f32 %v43, %v47
    %vm49 = vweird.f32 %v32
    %vm50 = vweird.f32 %v43
    %vm51 = vmor %vm49, %vm50
    %v52 = vsel %vm51, %v43, %v48
    %v53 = vmul.f32 %v12, %v42
    %v54 = vmul.f32 %v13, %v52
    %v55 = vmul.f32 %v14, %v14
    %v56 = vmul.f32 %v15, %v15
    %v57 = vmul.f32 %v16, %v16
    %v58 = vmul.f32 %v17, %v17
    %v59 = vmul.f32 %v18, %v18
    %v60 = vmul.f32 %v19, %v19
    %v61 = vmul.f32 %v20, %v20
    %v62 = vmul.f32 %v21, %v21
    %vm63 = vcmask 130048
    %v64 = vsel %vm63, %v55, 0.0
    %v65 = vsel %vm63, %v56, 0.0
    %v66 = vadd.f32 %v64, %v65
    %v67 = vsel %vm63, %v57, 0.0
    %v68 = vadd.f32 %v66, %v67
    %v69 = vsel %vm63, %v58, 0.0
    %v70 = vadd.f32 %v68, %v69
    %v71 = vrot.slane %v70, 4
    %v72 = vadd.f32 %v70, %v71
    %v73 = vrot.slane %v72, 2
    %v74 = vadd.f32 %v72, %v73
    %v75 = vrot.slane %v74, 1
    %v76 = vadd.f32 %v74, %v75
    %v77 = vsel %vm63, %v59, 0.0
    %v78 = vsel %vm63, %v60, 0.0
    %v79 = vadd.f32 %v77, %v78
    %v80 = vsel %vm63, %v61, 0.0
    %v81 = vadd.f32 %v79, %v80
    %v82 = vsel %vm63, %v62, 0.0
    %v83 = vadd.f32 %v81, %v82
    %v84 = vrot.slane %v83, 4
    %v85 = vadd.f32 %v83, %v84
    %v86 = vrot.slane %v85, 2
    %v87 = vadd.f32 %v85, %v86
    %v88 = vrot.slane %v87, 1
    %v89 = vadd.f32 %v87, %v88
    %v90 = vmax.f32 %v76, 1e-24
    %v91 = vmax.f32 %v89, 1e-24
    %v92 = vrsqrt.pop %v90
    %v93 = vmul.f32 %v92, %v90
    %v94 = vmul.f32 %v93, %v92
    %v95 = vmul.f32 0.5, %v94
    %v96 = vsub.f32 1.5, %v95
    %v97 = vmul.f32 %v92, %v96
    %vm98 = vweird.f32 %v90
    %vm99 = vweird.f32 %v92
    %vm100 = vmor %vm98, %vm99
    %v101 = vsel %vm100, %v92, %v97
    %v102 = vrsqrt.pop %v91
    %v103 = vmul.f32 %v102, %v91
    %v104 = vmul.f32 %v103, %v102
    %v105 = vmul.f32 0.5, %v104
    %v106 = vsub.f32 1.5, %v105
    %v107 = vmul.f32 %v102, %v106
    %vm108 = vweird.f32 %v91
    %vm109 = vweird.f32 %v102
    %vm110 = vmor %vm108, %vm109
    %v111 = vsel %vm110, %v102, %v107
    %v113 = vsel %vm24, %v53, 0
    %115 = vmatpush.msra.mxu0 0.0
    %116 = vmatpush.msra.mxu0 0.0
    %117 = vmatpush.msra.mxu0 0.0
    %118 = vmatpush.msra.mxu0 0.0
    %119 = vmatpush.msra.mxu0 0.0
    %120 = vmatpush.msra.mxu0 0.0
    %121 = vmatpush.msra.mxu0 0.0
    %122 = vmatpush.msra.mxu0 0.0
    %123 = vmatpush.msra.mxu0 0.0
    %124 = vmatpush.msra.mxu0 0.0
    %125 = vmatpush.msra.mxu0 0.0
    %126 = vmatpush.msra.mxu0 0.0
    %v127 = vand.u32 %v17, 4294901760
    %128 = vmatpush.msra.mxu0 %v127
    %v129 = vand.u32 %v16, 4294901760
    %130 = vmatpush.msra.mxu0 %v129
    %v131 = vand.u32 %v15, 4294901760
    %132 = vmatpush.msra.mxu0 %v131
    %v133 = vand.u32 %v14, 4294901760
    %134 = vmatpush.msra.mxu0 %v133
    %v135 = vand.u32 %v113, 4294901760
    %v136 = vsub.f32 %v113, %v135
    %v137 = vand.u32 %v136, 4294901760
    %v138 = vsub.f32 %v136, %v137
    %v139 = vand.u32 %v138, 4294901760
    %140 = vmatmul.f32.gmra.mxu0 %v139
    %v141 = vpop.f32.mrf.mxu0
    %v142 = vadd.f32 0.0, %v141
    %143 = vdwg.mxu0
    %144 = vmatpush.msra.mxu0 0.0
    %145 = vmatpush.msra.mxu0 0.0
    %146 = vmatpush.msra.mxu0 0.0
    %147 = vmatpush.msra.mxu0 0.0
    %148 = vmatpush.msra.mxu0 0.0
    %149 = vmatpush.msra.mxu0 0.0
    %150 = vmatpush.msra.mxu0 0.0
    %151 = vmatpush.msra.mxu0 0.0
    %152 = vmatpush.msra.mxu0 0.0
    %153 = vmatpush.msra.mxu0 0.0
    %154 = vmatpush.msra.mxu0 0.0
    %155 = vmatpush.msra.mxu0 0.0
    %v156 = vand.u32 %v17, 4294901760
    %v157 = vsub.f32 %v17, %v156
    %v158 = vand.u32 %v157, 4294901760
    %v159 = vsub.f32 %v157, %v158
    %v160 = vand.u32 %v159, 4294901760
    %161 = vmatpush.msra.mxu0 %v160
    %v162 = vand.u32 %v16, 4294901760
    %v163 = vsub.f32 %v16, %v162
    %v164 = vand.u32 %v163, 4294901760
    %v165 = vsub.f32 %v163, %v164
    %v166 = vand.u32 %v165, 4294901760
    %167 = vmatpush.msra.mxu0 %v166
    %v168 = vand.u32 %v15, 4294901760
    %v169 = vsub.f32 %v15, %v168
    %v170 = vand.u32 %v169, 4294901760
    %v171 = vsub.f32 %v169, %v170
    %v172 = vand.u32 %v171, 4294901760
    %173 = vmatpush.msra.mxu0 %v172
    %v174 = vand.u32 %v14, 4294901760
    %v175 = vsub.f32 %v14, %v174
    %v176 = vand.u32 %v175, 4294901760
    %v177 = vsub.f32 %v175, %v176
    %v178 = vand.u32 %v177, 4294901760
    %179 = vmatpush.msra.mxu0 %v178
    %v180 = vand.u32 %v113, 4294901760
    %181 = vmatmul.f32.gmra.mxu0 %v180
    %v182 = vpop.f32.mrf.mxu0
    %v183 = vadd.f32 %v142, %v182
    %184 = vdwg.mxu0
    %185 = vmatpush.msra.mxu0 0.0
    %186 = vmatpush.msra.mxu0 0.0
    %187 = vmatpush.msra.mxu0 0.0
    %188 = vmatpush.msra.mxu0 0.0
    %189 = vmatpush.msra.mxu0 0.0
    %190 = vmatpush.msra.mxu0 0.0
    %191 = vmatpush.msra.mxu0 0.0
    %192 = vmatpush.msra.mxu0 0.0
    %193 = vmatpush.msra.mxu0 0.0
    %194 = vmatpush.msra.mxu0 0.0
    %195 = vmatpush.msra.mxu0 0.0
    %196 = vmatpush.msra.mxu0 0.0
    %v197 = vand.u32 %v17, 4294901760
    %v198 = vsub.f32 %v17, %v197
    %199 = vmatpush.msra.mxu0 %v198
    %v200 = vand.u32 %v16, 4294901760
    %v201 = vsub.f32 %v16, %v200
    %202 = vmatpush.msra.mxu0 %v201
    %v203 = vand.u32 %v15, 4294901760
    %v204 = vsub.f32 %v15, %v203
    %205 = vmatpush.msra.mxu0 %v204
    %v206 = vand.u32 %v14, 4294901760
    %v207 = vsub.f32 %v14, %v206
    %208 = vmatpush.msra.mxu0 %v207
    %v209 = vand.u32 %v113, 4294901760
    %v210 = vsub.f32 %v113, %v209
    %211 = vmatmul.f32.gmra.mxu0 %v210
    %v212 = vpop.f32.mrf.mxu0
    %v213 = vadd.f32 %v183, %v212
    %214 = vdwg.mxu0
    %215 = vmatpush.msra.mxu0 0.0
    %216 = vmatpush.msra.mxu0 0.0
    %217 = vmatpush.msra.mxu0 0.0
    %218 = vmatpush.msra.mxu0 0.0
    %219 = vmatpush.msra.mxu0 0.0
    %220 = vmatpush.msra.mxu0 0.0
    %221 = vmatpush.msra.mxu0 0.0
    %222 = vmatpush.msra.mxu0 0.0
    %223 = vmatpush.msra.mxu0 0.0
    %224 = vmatpush.msra.mxu0 0.0
    %225 = vmatpush.msra.mxu0 0.0
    %226 = vmatpush.msra.mxu0 0.0
    %v227 = vand.u32 %v17, 4294901760
    %228 = vmatpush.msra.mxu0 %v227
    %v229 = vand.u32 %v16, 4294901760
    %230 = vmatpush.msra.mxu0 %v229
    %v231 = vand.u32 %v15, 4294901760
    %232 = vmatpush.msra.mxu0 %v231
    %v233 = vand.u32 %v14, 4294901760
    %234 = vmatpush.msra.mxu0 %v233
    %v235 = vand.u32 %v113, 4294901760
    %v236 = vsub.f32 %v113, %v235
    %v237 = vand.u32 %v236, 4294901760
    %238 = vmatmul.f32.gmra.mxu0 %v237
    %v239 = vpop.f32.mrf.mxu0
    %v240 = vadd.f32 %v213, %v239
    %241 = vdwg.mxu0
    %242 = vmatpush.msra.mxu0 0.0
    %243 = vmatpush.msra.mxu0 0.0
    %244 = vmatpush.msra.mxu0 0.0
    %245 = vmatpush.msra.mxu0 0.0
    %246 = vmatpush.msra.mxu0 0.0
    %247 = vmatpush.msra.mxu0 0.0
    %248 = vmatpush.msra.mxu0 0.0
    %249 = vmatpush.msra.mxu0 0.0
    %250 = vmatpush.msra.mxu0 0.0
    %251 = vmatpush.msra.mxu0 0.0
    %252 = vmatpush.msra.mxu0 0.0
    %253 = vmatpush.msra.mxu0 0.0
    %v254 = vand.u32 %v17, 4294901760
    %v255 = vsub.f32 %v17, %v254
    %v256 = vand.u32 %v255, 4294901760
    %257 = vmatpush.msra.mxu0 %v256
    %v258 = vand.u32 %v16, 4294901760
    %v259 = vsub.f32 %v16, %v258
    %v260 = vand.u32 %v259, 4294901760
    %261 = vmatpush.msra.mxu0 %v260
    %v262 = vand.u32 %v15, 4294901760
    %v263 = vsub.f32 %v15, %v262
    %v264 = vand.u32 %v263, 4294901760
    %265 = vmatpush.msra.mxu0 %v264
    %v266 = vand.u32 %v14, 4294901760
    %v267 = vsub.f32 %v14, %v266
    %v268 = vand.u32 %v267, 4294901760
    %269 = vmatpush.msra.mxu0 %v268
    %v270 = vand.u32 %v113, 4294901760
    %271 = vmatmul.f32.gmra.mxu0 %v270
    %v272 = vpop.f32.mrf.mxu0
    %v273 = vadd.f32 %v240, %v272
    %274 = vdwg.mxu0
    %275 = vmatpush.msra.mxu0 0.0
    %276 = vmatpush.msra.mxu0 0.0
    %277 = vmatpush.msra.mxu0 0.0
    %278 = vmatpush.msra.mxu0 0.0
    %279 = vmatpush.msra.mxu0 0.0
    %280 = vmatpush.msra.mxu0 0.0
    %281 = vmatpush.msra.mxu0 0.0
    %282 = vmatpush.msra.mxu0 0.0
    %283 = vmatpush.msra.mxu0 0.0
    %284 = vmatpush.msra.mxu0 0.0
    %285 = vmatpush.msra.mxu0 0.0
    %286 = vmatpush.msra.mxu0 0.0
    %v287 = vand.u32 %v17, 4294901760
    %288 = vmatpush.msra.mxu0 %v287
    %v289 = vand.u32 %v16, 4294901760
    %290 = vmatpush.msra.mxu0 %v289
    %v291 = vand.u32 %v15, 4294901760
    %292 = vmatpush.msra.mxu0 %v291
    %v293 = vand.u32 %v14, 4294901760
    %294 = vmatpush.msra.mxu0 %v293
    %v295 = vand.u32 %v113, 4294901760
    %296 = vmatmul.f32.gmra.mxu0 %v295
    %v297 = vpop.f32.mrf.mxu0
    %v298 = vadd.f32 %v273, %v297
    %299 = vdwg.mxu0
    %v301 = vsel %vm24, %v54, 0
    %303 = vmatpush.msra.mxu0 0.0
    %304 = vmatpush.msra.mxu0 0.0
    %305 = vmatpush.msra.mxu0 0.0
    %306 = vmatpush.msra.mxu0 0.0
    %307 = vmatpush.msra.mxu0 0.0
    %308 = vmatpush.msra.mxu0 0.0
    %309 = vmatpush.msra.mxu0 0.0
    %310 = vmatpush.msra.mxu0 0.0
    %311 = vmatpush.msra.mxu0 0.0
    %312 = vmatpush.msra.mxu0 0.0
    %313 = vmatpush.msra.mxu0 0.0
    %314 = vmatpush.msra.mxu0 0.0
    %v315 = vand.u32 %v21, 4294901760
    %316 = vmatpush.msra.mxu0 %v315
    %v317 = vand.u32 %v20, 4294901760
    %318 = vmatpush.msra.mxu0 %v317
    %v319 = vand.u32 %v19, 4294901760
    %320 = vmatpush.msra.mxu0 %v319
    %v321 = vand.u32 %v18, 4294901760
    %322 = vmatpush.msra.mxu0 %v321
    %v323 = vand.u32 %v301, 4294901760
    %v324 = vsub.f32 %v301, %v323
    %v325 = vand.u32 %v324, 4294901760
    %v326 = vsub.f32 %v324, %v325
    %v327 = vand.u32 %v326, 4294901760
    %328 = vmatmul.f32.gmra.mxu0 %v327
    %v329 = vpop.f32.mrf.mxu0
    %v330 = vadd.f32 0.0, %v329
    %331 = vdwg.mxu0
    %332 = vmatpush.msra.mxu0 0.0
    %333 = vmatpush.msra.mxu0 0.0
    %334 = vmatpush.msra.mxu0 0.0
    %335 = vmatpush.msra.mxu0 0.0
    %336 = vmatpush.msra.mxu0 0.0
    %337 = vmatpush.msra.mxu0 0.0
    %338 = vmatpush.msra.mxu0 0.0
    %339 = vmatpush.msra.mxu0 0.0
    %340 = vmatpush.msra.mxu0 0.0
    %341 = vmatpush.msra.mxu0 0.0
    %342 = vmatpush.msra.mxu0 0.0
    %343 = vmatpush.msra.mxu0 0.0
    %v344 = vand.u32 %v21, 4294901760
    %v345 = vsub.f32 %v21, %v344
    %v346 = vand.u32 %v345, 4294901760
    %v347 = vsub.f32 %v345, %v346
    %v348 = vand.u32 %v347, 4294901760
    %349 = vmatpush.msra.mxu0 %v348
    %v350 = vand.u32 %v20, 4294901760
    %v351 = vsub.f32 %v20, %v350
    %v352 = vand.u32 %v351, 4294901760
    %v353 = vsub.f32 %v351, %v352
    %v354 = vand.u32 %v353, 4294901760
    %355 = vmatpush.msra.mxu0 %v354
    %v356 = vand.u32 %v19, 4294901760
    %v357 = vsub.f32 %v19, %v356
    %v358 = vand.u32 %v357, 4294901760
    %v359 = vsub.f32 %v357, %v358
    %v360 = vand.u32 %v359, 4294901760
    %361 = vmatpush.msra.mxu0 %v360
    %v362 = vand.u32 %v18, 4294901760
    %v363 = vsub.f32 %v18, %v362
    %v364 = vand.u32 %v363, 4294901760
    %v365 = vsub.f32 %v363, %v364
    %v366 = vand.u32 %v365, 4294901760
    %367 = vmatpush.msra.mxu0 %v366
    %v368 = vand.u32 %v301, 4294901760
    %369 = vmatmul.f32.gmra.mxu0 %v368
    %v370 = vpop.f32.mrf.mxu0
    %v371 = vadd.f32 %v330, %v370
    %372 = vdwg.mxu0
    %373 = vmatpush.msra.mxu0 0.0
    %374 = vmatpush.msra.mxu0 0.0
    %375 = vmatpush.msra.mxu0 0.0
    %376 = vmatpush.msra.mxu0 0.0
    %377 = vmatpush.msra.mxu0 0.0
    %378 = vmatpush.msra.mxu0 0.0
    %379 = vmatpush.msra.mxu0 0.0
    %380 = vmatpush.msra.mxu0 0.0
    %381 = vmatpush.msra.mxu0 0.0
    %382 = vmatpush.msra.mxu0 0.0
    %383 = vmatpush.msra.mxu0 0.0
    %384 = vmatpush.msra.mxu0 0.0
    %v385 = vand.u32 %v21, 4294901760
    %v386 = vsub.f32 %v21, %v385
    %387 = vmatpush.msra.mxu0 %v386
    %v388 = vand.u32 %v20, 4294901760
    %v389 = vsub.f32 %v20, %v388
    %390 = vmatpush.msra.mxu0 %v389
    %v391 = vand.u32 %v19, 4294901760
    %v392 = vsub.f32 %v19, %v391
    %393 = vmatpush.msra.mxu0 %v392
    %v394 = vand.u32 %v18, 4294901760
    %v395 = vsub.f32 %v18, %v394
    %396 = vmatpush.msra.mxu0 %v395
    %v397 = vand.u32 %v301, 4294901760
    %v398 = vsub.f32 %v301, %v397
    %399 = vmatmul.f32.gmra.mxu0 %v398
    %v400 = vpop.f32.mrf.mxu0
    %v401 = vadd.f32 %v371, %v400
    %402 = vdwg.mxu0
    %403 = vmatpush.msra.mxu0 0.0
    %404 = vmatpush.msra.mxu0 0.0
    %405 = vmatpush.msra.mxu0 0.0
    %406 = vmatpush.msra.mxu0 0.0
    %407 = vmatpush.msra.mxu0 0.0
    %408 = vmatpush.msra.mxu0 0.0
    %409 = vmatpush.msra.mxu0 0.0
    %410 = vmatpush.msra.mxu0 0.0
    %411 = vmatpush.msra.mxu0 0.0
    %412 = vmatpush.msra.mxu0 0.0
    %413 = vmatpush.msra.mxu0 0.0
    %414 = vmatpush.msra.mxu0 0.0
    %v415 = vand.u32 %v21, 4294901760
    %416 = vmatpush.msra.mxu0 %v415
    %v417 = vand.u32 %v20, 4294901760
    %418 = vmatpush.msra.mxu0 %v417
    %v419 = vand.u32 %v19, 4294901760
    %420 = vmatpush.msra.mxu0 %v419
    %v421 = vand.u32 %v18, 4294901760
    %422 = vmatpush.msra.mxu0 %v421
    %v423 = vand.u32 %v301, 4294901760
    %v424 = vsub.f32 %v301, %v423
    %v425 = vand.u32 %v424, 4294901760
    %426 = vmatmul.f32.gmra.mxu0 %v425
    %v427 = vpop.f32.mrf.mxu0
    %v428 = vadd.f32 %v401, %v427
    %429 = vdwg.mxu0
    %430 = vmatpush.msra.mxu0 0.0
    %431 = vmatpush.msra.mxu0 0.0
    %432 = vmatpush.msra.mxu0 0.0
    %433 = vmatpush.msra.mxu0 0.0
    %434 = vmatpush.msra.mxu0 0.0
    %435 = vmatpush.msra.mxu0 0.0
    %436 = vmatpush.msra.mxu0 0.0
    %437 = vmatpush.msra.mxu0 0.0
    %438 = vmatpush.msra.mxu0 0.0
    %439 = vmatpush.msra.mxu0 0.0
    %440 = vmatpush.msra.mxu0 0.0
    %441 = vmatpush.msra.mxu0 0.0
    %v442 = vand.u32 %v21, 4294901760
    %v443 = vsub.f32 %v21, %v442
    %v444 = vand.u32 %v443, 4294901760
    %445 = vmatpush.msra.mxu0 %v444
    %v446 = vand.u32 %v20, 4294901760
    %v447 = vsub.f32 %v20, %v446
    %v448 = vand.u32 %v447, 4294901760
    %449 = vmatpush.msra.mxu0 %v448
    %v450 = vand.u32 %v19, 4294901760
    %v451 = vsub.f32 %v19, %v450
    %v452 = vand.u32 %v451, 4294901760
    %453 = vmatpush.msra.mxu0 %v452
    %v454 = vand.u32 %v18, 4294901760
    %v455 = vsub.f32 %v18, %v454
    %v456 = vand.u32 %v455, 4294901760
    %457 = vmatpush.msra.mxu0 %v456
    %v458 = vand.u32 %v301, 4294901760
    %459 = vmatmul.f32.gmra.mxu0 %v458
    %v460 = vpop.f32.mrf.mxu0
    %v461 = vadd.f32 %v428, %v460
    %462 = vdwg.mxu0
    %463 = vmatpush.msra.mxu0 0.0
    %464 = vmatpush.msra.mxu0 0.0
    %465 = vmatpush.msra.mxu0 0.0
    %466 = vmatpush.msra.mxu0 0.0
    %467 = vmatpush.msra.mxu0 0.0
    %468 = vmatpush.msra.mxu0 0.0
    %469 = vmatpush.msra.mxu0 0.0
    %470 = vmatpush.msra.mxu0 0.0
    %471 = vmatpush.msra.mxu0 0.0
    %472 = vmatpush.msra.mxu0 0.0
    %473 = vmatpush.msra.mxu0 0.0
    %474 = vmatpush.msra.mxu0 0.0
    %v475 = vand.u32 %v21, 4294901760
    %476 = vmatpush.msra.mxu0 %v475
    %v477 = vand.u32 %v20, 4294901760
    %478 = vmatpush.msra.mxu0 %v477
    %v479 = vand.u32 %v19, 4294901760
    %480 = vmatpush.msra.mxu0 %v479
    %v481 = vand.u32 %v18, 4294901760
    %482 = vmatpush.msra.mxu0 %v481
    %v483 = vand.u32 %v301, 4294901760
    %484 = vmatmul.f32.gmra.mxu0 %v483
    %v485 = vpop.f32.mrf.mxu0
    %v486 = vadd.f32 %v461, %v485
    %487 = vdwg.mxu0
    %v488 = vmul.f32 %v298, %v101
    %v489 = vmul.f32 %v486, %v111
    %v490 = vsel %vm63, %v488, -inf
    %491 = vmax.xlane.f32.xlu0 %v490
    %v492 = vpop.xlane.xlu0 %491
    %v493 = vsel %vm63, %v489, -inf
    %494 = vmax.xlane.f32.xlu0 %v493
    %v495 = vpop.xlane.xlu0 %494
    %v496 = vrot.slane %v490, 4
    %v497 = vmax.f32 %v490, %v496
    %v498 = vrot.slane %v497, 2
    %v499 = vmax.f32 %v497, %v498
    %v500 = vrot.slane %v499, 1
    %v501 = vmax.f32 %v499, %v500
    %v502 = vrot.slane %v493, 4
    %v503 = vmax.f32 %v493, %v502
    %v504 = vrot.slane %v503, 2
    %v505 = vmax.f32 %v503, %v504
    %v506 = vrot.slane %v505, 1
    %v507 = vmax.f32 %v505, %v506
    %v508 = vrot.slane %v492, 4
    %v509 = vadd.f32 %v492, %v508
    %v510 = vrot.slane %v509, 2
    %v511 = vadd.f32 %v509, %v510
    %v512 = vrot.slane %v511, 1
    %v513 = vadd.f32 %v511, %v512
    %v514 = vrot.slane %v495, 4
    %v515 = vadd.f32 %v495, %v514
    %v516 = vrot.slane %v515, 2
    %v517 = vadd.f32 %v515, %v516
    %v518 = vrot.slane %v517, 1
    %v519 = vadd.f32 %v517, %v518
    %v520 = vmul.f32 %v513, 0.125
    %v521 = vmul.f32 %v519, 0.125
    %v522 = vsel %vm63, %v501, 0.0
    %523 = vadd.xlane.f32.xlu0 %v522
    %v524 = vpop.xlane.xlu0 %523
    %v525 = vsel %vm63, %v507, 0.0
    %526 = vadd.xlane.f32.xlu0 %v525
    %v527 = vpop.xlane.xlu0 %526
    %v528 = vmul.f32 %v524, 0.0625
    %v529 = vmul.f32 %v527, 0.0625
    %v530 = vadd.f32 %v520, %v528
    %v531 = vadd.f32 %v521, %v529
    %v532 = vmul.f32 %v530, 0.5
    %v533 = vmul.f32 %v531, 0.5
    %v534 = vsub.f32 1.0, %v532
    %v535 = vsub.f32 1.0, %v533
    %v536 = vrot.slane %v488, 1
    %v537 = vrot.slane %v489, 1
    %v538 = vsub.f32 %v536, %v488
    %v539 = vsub.f32 %v537, %v489
    %v540 = vand.u32 2147483647, %v538
    %v541 = vand.u32 2147483647, %v539
    %v542 = vsel %vm63, %v540, 0.0
    %543 = vadd.xlane.f32.xlu0 %v542
    %v544 = vpop.xlane.xlu0 %543
    %v545 = vsel %vm63, %v541, 0.0
    %546 = vadd.xlane.f32.xlu0 %v545
    %v547 = vpop.xlane.xlu0 %546
    %v548 = vlaneseq
    %v549 = vshrl.u32 %v548, 7
    %vm550 = vcmp.lt.s32.totalorder %v549, 7
    %v551 = vsel %vm550, %v544, 0.0
    %v552 = vsel %vm550, %v547, 0.0
    %v553 = vrot.slane %v551, 4
    %v554 = vadd.f32 %v551, %v553
    %v555 = vrot.slane %v554, 2
    %v556 = vadd.f32 %v554, %v555
    %v557 = vrot.slane %v556, 1
    %v558 = vadd.f32 %v556, %v557
    %v559 = vrot.slane %v552, 4
    %v560 = vadd.f32 %v552, %v559
    %v561 = vrot.slane %v560, 2
    %v562 = vadd.f32 %v560, %v561
    %v563 = vrot.slane %v562, 1
    %v564 = vadd.f32 %v562, %v563
    %v565 = vmul.f32 %v558, 0.0078125
    %v566 = vmul.f32 %v564, 0.0078125
    %v567 = vmul.f32 %v565, 0.1
    %v568 = vmul.f32 %v566, 0.1
    %v569 = vadd.f32 %v534, %v567
    %v570 = vadd.f32 %v535, %v568
    %v571 = vlaneseq
    %v572 = vand.u32 %v571, 127
    %vm573 = vcmp.eq.s32.totalorder %v572, 0
    %vm574 = vcmp.eq.s32.totalorder %v572, 1
    %v575 = vsel %vm573, %v569, 0.0
    %v576 = vsel %vm574, %v570, 0.0
    %vm577 = vcmask 15360
    %v578 = vsel %vm577, %v575, 0.0
    %v579 = vsel %vm577, %v576, 0.0
    %v580 = vadd.f32 %v578, %v579
    %vm581 = vcmask 8192
    %582 = vst.msk [vmem:[#allocation2] sm:$0x1] %vm581, %v580
    // Predicated region
    $region10: #{tpu_custom_call.1} parent=1 // pred_check
      _
    $region11: #{tpu_custom_call.1} parent=1 // pred_check_branch
      %584 = sbr.rel (0) target = $region13
    $region12: #{tpu_custom_call.1} parent=1 // pred_region
      %586 = vsyncadd [#allocation3], 0
      %s588 = sshll.u32 [#allocation2], 4
      %s589 = int_to_ptr.vmem [resolvable:$true] %s588
      %s590 = sshll.u32 %s2, 4
      %s591 = int_to_ptr.hbm [resolvable:$true] %s590
      %593 = dma.vmem_to_hbm [thread:$0]  %s589, 16, %s591, [#allocation3]
    $region13: #{tpu_custom_call.1} parent=1 // pred_fallthru
      _
    // Predicated region
    $region14: #{tpu_custom_call.1} parent=1 // pred_check
      _
    $region15: #{tpu_custom_call.1} parent=1 // pred_check_branch
      %595 = sbr.rel (0) target = $region17
    $region16: #{tpu_custom_call.1} parent=1 // pred_region
      %597 = dma.done [#allocation3], 16
    $region17: #{tpu_custom_call.1} parent=1 // pred_fallthru
      _
    %598 = vsyncpa [#allocation3], 1

</llo_original>
